<compile_context>
chip_gen: v7x
topology: tpu7x:2x2x1
jax: 0.10.0
libtpu: 0.0.40
codegen_flags: <defaults>
</compile_context>

<pallas_src>
import jax
import jax.numpy as jnp
from jax.experimental import pallas as pl
from jax.experimental.pallas import tpu as pltpu

EMBEDDING_DIM = 50
FILTER_SIZES = (2, 3, 4)
N_FILTERS = 100
DROPOUT = 0.5  # inference-mode: identity

LANE = 128


def _round_up(x, m):
    return (x + m - 1) // m * m


def _make_kernel(filter_sizes, TB, S, P, D_pad, F_pad):
    max_fs = max(filter_sizes)
    NF = len(filter_sizes) * F_pad

    def kernel(emb_ref, w_ref, b_ref, fcw_ref, fcb_ref, out_ref):
        emb = emb_ref[...]                                 # [TB, S_im, D_pad] bf16

        # Fused im2col over the largest filter size: lane-aligned concat of
        # max_fs shifted time windows, then ONE MXU matmul for all filter
        # sizes (taps >= fs are zero in the pre-packed weight).
        x3d = jnp.concatenate([emb[:, k:k + P, :] for k in range(max_fs)],
                              axis=-1)                     # [TB, P, max_fs*D_pad]
        x2d = x3d.reshape(TB * P, max_fs * D_pad)
        acc = jnp.dot(x2d, w_ref[...],
                      preferred_element_type=jnp.float32)  # [TB*P, NF] f32
        acc = acc.reshape(TB, P, NF)                       # P multiple of 8 -> free

        # Per-filter-size max-pool over the valid window positions only
        # (static slices; no full-width iota / -inf mask). The lane slices are
        # 128-aligned, the pooled chunks are lane-concatenated back (free).
        pooled = jnp.concatenate(
            [jnp.max(acc[:, :S - fs + 1, j * F_pad:(j + 1) * F_pad], axis=1)
             for j, fs in enumerate(filter_sizes)], axis=-1)   # [TB, NF]

        # Bias + ReLU after the pool (== ReLU-then-pool, both monotone).
        cat = jnp.maximum(pooled + b_ref[...], 0.0)

        # TODO(synk): nn.Dropout(p=0.5) is the inference-mode identity here
        # (training-mode stochastic mask/scale not implemented).
        out_ref[...] = (jnp.dot(cat, fcw_ref[...],
                                preferred_element_type=jnp.float32)
                        + fcb_ref[...])

    return kernel


def cnn_forward(text, emb_table, conv_params, fc_w, fc_b,
                *, filter_sizes=FILTER_SIZES):
    """text: [S, B] int32 token ids (PyTorch seq-major convention).
    emb_table: [vocab, D] f32. conv_params: list of (w [fs, D, F], b [1, F]).
    fc_w: [len(filter_sizes)*F, O]. fc_b: [1, O]."""
    tokens = text.T                                        # [B, S]
    B, S = tokens.shape
    D = emb_table.shape[1]
    F = conv_params[0][0].shape[-1]
    O = fc_w.shape[-1]
    n = len(filter_sizes)
    max_fs = max(filter_sizes)

    D_pad = _round_up(D, LANE)
    F_pad = _round_up(F, LANE)
    O_pad = _round_up(O, LANE)
    NF = n * F_pad

    P = _round_up(S, 16)                       # window positions (bf16-sublane)
    S_im = _round_up(P + max_fs - 1, 8)        # per-batch padded time extent
    TB = min(B, 8)                             # batch tile (bounds VMEM on v7x)
    B_pad = _round_up(B, TB)

    # Embedding gather stays plain-JAX glue (pad + bf16 cast done once on the
    # table).  TODO(synk): fuse the gather in-kernel (scalar-prefetched token
    # ids + VMEM-resident table) to save the HBM round trip of [B,S,D_pad].
    tbl = jnp.pad(emb_table, ((0, 0), (0, D_pad - D))).astype(jnp.bfloat16)
    embedded = jnp.take(tbl, tokens, axis=0)               # [B, S, D_pad] bf16
    emb_in = jnp.pad(embedded,
                     ((0, B_pad - B), (0, S_im - S), (0, 0)))  # zero rows

    # Combined conv weight: one [max_fs*D_pad, n*F_pad] matrix. Tap k of
    # filter size fs_j lives at rows [k*D_pad, k*D_pad+D), cols
    # [j*F_pad, j*F_pad+F); taps k >= fs_j are zero.
    w_all = jnp.zeros((max_fs * D_pad, NF), jnp.float32)
    b_parts = []
    for j, (w, b) in enumerate(conv_params):
        fs = w.shape[0]
        w_p = jnp.pad(w, ((0, 0), (0, D_pad - D), (0, F_pad - F)))
        w_all = w_all.at[:fs * D_pad, j * F_pad:(j + 1) * F_pad].set(
            w_p.reshape(fs * D_pad, F_pad))
        b_parts.append(jnp.pad(jnp.reshape(b, (1, F)),
                               ((0, 0), (0, F_pad - F))))
    w_all = w_all.astype(jnp.bfloat16)
    b_all = jnp.concatenate(b_parts, axis=1).astype(jnp.float32)   # [1, NF]

    # Stacked FC weight (kept f32: tiny matmul, tighter accuracy).
    # TODO(synk): optional stylo_features concat path of the PyTorch module is
    # not implemented (forward matches stylo_features=None).
    fcw_all = jnp.zeros((NF, O_pad), jnp.float32)
    for j in range(n):
        fcw_all = fcw_all.at[j * F_pad:j * F_pad + F, :O].set(
            fc_w[j * F:(j + 1) * F, :])
    fcb_p = jnp.pad(jnp.reshape(fc_b, (1, O)),
                    ((0, 0), (0, O_pad - O))).astype(jnp.float32)

    kernel = _make_kernel(tuple(filter_sizes), TB, S, P, D_pad, F_pad)
    out_pad = pl.pallas_call(
        kernel,
        out_shape=jax.ShapeDtypeStruct((B_pad, O_pad), jnp.float32),
        grid=(B_pad // TB,),
        in_specs=[
            pl.BlockSpec((TB, S_im, D_pad), lambda i: (i, 0, 0)),
            pl.BlockSpec((max_fs * D_pad, NF), lambda i: (0, 0)),
            pl.BlockSpec((1, NF), lambda i: (0, 0)),
            pl.BlockSpec((NF, O_pad), lambda i: (0, 0)),
            pl.BlockSpec((1, O_pad), lambda i: (0, 0)),
        ],
        out_specs=pl.BlockSpec((TB, O_pad), lambda i: (i, 0)),
        compiler_params=pltpu.CompilerParams(
            dimension_semantics=("parallel",)),
    )(emb_in, w_all, b_all, fcw_all, fcb_p)
    return out_pad[:B, :O]


if __name__ == "__main__":
    key = jax.random.PRNGKey(0)
    B, S = 2, 16
    vocab = 30
    D, F, O = EMBEDDING_DIM, N_FILTERS, 4

    keys = jax.random.split(key, 3 + len(FILTER_SIZES))
    k_emb, k_txt, k_fc = keys[0], keys[1], keys[2]
    k_convs = keys[3:]

    emb_table = jax.random.normal(k_emb, (vocab, D), jnp.float32) * 0.1
    text = jax.random.randint(k_txt, (S, B), 0, vocab, dtype=jnp.int32)

    conv_params = []
    for fs, kc in zip(FILTER_SIZES, k_convs):
        kw, kb = jax.random.split(kc)
        w = jax.random.normal(kw, (fs, D, F), jnp.float32) * 0.1
        b = jax.random.normal(kb, (1, F), jnp.float32) * 0.1
        conv_params.append((w, b))

    kfw, kfb = jax.random.split(k_fc)
    fc_w = jax.random.normal(kfw, (len(FILTER_SIZES) * F, O), jnp.float32) * 0.1
    fc_b = jax.random.normal(kfb, (1, O), jnp.float32) * 0.1

    out = cnn_forward(text, emb_table, conv_params, fc_w, fc_b)
    out = jax.block_until_ready(out)

    # Pure-JAX f32 reference (matches the PyTorch forward, eval-mode dropout).
    emb_ref = emb_table[text.T]
    pooled_ref = []
    for (w, b) in conv_params:
        fs = w.shape[0]
        L = S - fs + 1
        conv = sum(
            jnp.einsum("bld,df->blf", emb_ref[:, k:k + L, :], w[k])
            for k in range(fs)
        ) + b[None, :, :]
        pooled_ref.append(jnp.max(jax.nn.relu(conv), axis=1))
    ref = jnp.concatenate(pooled_ref, axis=1) @ fc_w + fc_b

    assert out.shape == (B, O)
    # bf16 MXU inputs with f32 accumulation: allow a slightly looser tolerance.
    assert jnp.allclose(out, ref, rtol=2e-2, atol=2e-2), (
        float(jnp.max(jnp.abs(out - ref))))
    print("KERNEL_OK")
</pallas_src>

<mosaic_0001>
module attributes {stable_mosaic.version = 11 : i64} {
  func.func @kernel(%arg0: i32, %arg1: memref<2x24x128xbf16, #tpu.memory_space<vmem>>, %arg2: memref<512x384xbf16, #tpu.memory_space<vmem>>, %arg3: memref<1x384xf32, #tpu.memory_space<vmem>>, %arg4: memref<384x128xf32, #tpu.memory_space<vmem>>, %arg5: memref<1x128xf32, #tpu.memory_space<vmem>>, %arg6: memref<2x128xf32, #tpu.memory_space<vmem>>) attributes {dimension_semantics = [#tpu.dimension_semantics<parallel>], iteration_bounds = array<i64: 1>, scalar_prefetch = 0 : i64, scratch_operands = 0 : i64, tpu.core_type = #tpu.core_type<tc>, window_params = [{transform_indices = @transform_0, window_bounds = array<i64: 2, 24, 128>}, {pipeline_mode = #tpu.pipeline_mode<synchronous>, transform_indices = @transform_1, window_bounds = array<i64: 512, 384>}, {pipeline_mode = #tpu.pipeline_mode<synchronous>, transform_indices = @transform_2, window_bounds = array<i64: 1, 384>}, {pipeline_mode = #tpu.pipeline_mode<synchronous>, transform_indices = @transform_3, window_bounds = array<i64: 384, 128>}, {pipeline_mode = #tpu.pipeline_mode<synchronous>, transform_indices = @transform_4, window_bounds = array<i64: 1, 128>}, {transform_indices = @transform_5, window_bounds = array<i64: 2, 128>}]} {
    %c0 = arith.constant 0 : index
    %c0_0 = arith.constant 0 : index
    %c0_1 = arith.constant 0 : index
    %0 = vector.load %arg1[%c0, %c0_0, %c0_1] : memref<2x24x128xbf16, #tpu.memory_space<vmem>>, vector<2x24x128xbf16>
    %1 = vector.extract_strided_slice %0 {offsets = [0, 0, 0], sizes = [2, 16, 128], strides = [1, 1, 1]} : vector<2x24x128xbf16> to vector<2x16x128xbf16>
    %2 = vector.extract_strided_slice %0 {offsets = [0, 1, 0], sizes = [2, 16, 128], strides = [1, 1, 1]} : vector<2x24x128xbf16> to vector<2x16x128xbf16>
    %3 = vector.extract_strided_slice %0 {offsets = [0, 2, 0], sizes = [2, 16, 128], strides = [1, 1, 1]} : vector<2x24x128xbf16> to vector<2x16x128xbf16>
    %4 = vector.extract_strided_slice %0 {offsets = [0, 3, 0], sizes = [2, 16, 128], strides = [1, 1, 1]} : vector<2x24x128xbf16> to vector<2x16x128xbf16>
    %5 = tpu.concatenate %1, %2, %3, %4 in 2 : vector<2x16x128xbf16>, vector<2x16x128xbf16>, vector<2x16x128xbf16>, vector<2x16x128xbf16> -> vector<2x16x512xbf16>
    %6 = vector.shape_cast %5 : vector<2x16x512xbf16> to vector<32x512xbf16>
    %c0_2 = arith.constant 0 : index
    %c0_3 = arith.constant 0 : index
    %7 = vector.load %arg2[%c0_2, %c0_3] : memref<512x384xbf16, #tpu.memory_space<vmem>>, vector<512x384xbf16>
    %cst = arith.constant dense<0.000000e+00> : vector<32x384xf32>
    %8 = tpu.matmul %6, %7, %cst {dimension_numbers = #tpu.dot_dimension_numbers<[1], [0], [0], [1], [0, 0, 1, 1], [], []>} : vector<32x512xbf16>, vector<512x384xbf16>, vector<32x384xf32> -> vector<32x384xf32>
    %9 = vector.shape_cast %8 : vector<32x384xf32> to vector<2x16x384xf32>
    %10 = vector.extract_strided_slice %9 {offsets = [0, 0, 0], sizes = [2, 15, 128], strides = [1, 1, 1]} : vector<2x16x384xf32> to vector<2x15x128xf32>
    %cst_4 = arith.constant dense<0xFF800000> : vector<2x128xf32>
    %11 = vector.multi_reduction <maximumf>, %10, %cst_4 [1] : vector<2x15x128xf32> to vector<2x128xf32>
    %12 = vector.extract_strided_slice %9 {offsets = [0, 0, 128], sizes = [2, 14, 128], strides = [1, 1, 1]} : vector<2x16x384xf32> to vector<2x14x128xf32>
    %cst_5 = arith.constant dense<0xFF800000> : vector<2x128xf32>
    %13 = vector.multi_reduction <maximumf>, %12, %cst_5 [1] : vector<2x14x128xf32> to vector<2x128xf32>
    %14 = vector.extract_strided_slice %9 {offsets = [0, 0, 256], sizes = [2, 13, 128], strides = [1, 1, 1]} : vector<2x16x384xf32> to vector<2x13x128xf32>
    %cst_6 = arith.constant dense<0xFF800000> : vector<2x128xf32>
    %15 = vector.multi_reduction <maximumf>, %14, %cst_6 [1] : vector<2x13x128xf32> to vector<2x128xf32>
    %16 = tpu.concatenate %11, %13, %15 in 1 : vector<2x128xf32>, vector<2x128xf32>, vector<2x128xf32> -> vector<2x384xf32>
    %c0_7 = arith.constant 0 : index
    %c0_8 = arith.constant 0 : index
    %17 = vector.load %arg3[%c0_7, %c0_8] : memref<1x384xf32, #tpu.memory_space<vmem>>, vector<1x384xf32>
    %18 = vector.broadcast %17 : vector<1x384xf32> to vector<2x384xf32>
    %19 = arith.addf %16, %18 : vector<2x384xf32>
    %cst_9 = arith.constant 0.000000e+00 : f32
    %20 = vector.broadcast %cst_9 : f32 to vector<2x384xf32>
    %21 = arith.maximumf %19, %20 : vector<2x384xf32>
    %c0_10 = arith.constant 0 : index
    %c0_11 = arith.constant 0 : index
    %22 = vector.load %arg4[%c0_10, %c0_11] : memref<384x128xf32, #tpu.memory_space<vmem>>, vector<384x128xf32>
    %cst_12 = arith.constant dense<0.000000e+00> : vector<2x128xf32>
    %23 = tpu.matmul %21, %22, %cst_12 {dimension_numbers = #tpu.dot_dimension_numbers<[1], [0], [0], [1], [0, 0, 1, 1], [], []>} : vector<2x384xf32>, vector<384x128xf32>, vector<2x128xf32> -> vector<2x128xf32>
    %c0_13 = arith.constant 0 : index
    %c0_14 = arith.constant 0 : index
    %24 = vector.load %arg5[%c0_13, %c0_14] : memref<1x128xf32, #tpu.memory_space<vmem>>, vector<1x128xf32>
    %25 = vector.broadcast %24 : vector<1x128xf32> to vector<2x128xf32>
    %26 = arith.addf %23, %25 : vector<2x128xf32>
    %c0_15 = arith.constant 0 : index
    %c0_16 = arith.constant 0 : index
    %27 = vector.load %arg6[%c0_15, %c0_16] : memref<2x128xf32, #tpu.memory_space<vmem>>, vector<2x128xf32>
    tpu.vector_store %arg6[%c0_15, %c0_16], %26 {strides = array<i32>} : memref<2x128xf32, #tpu.memory_space<vmem>>, vector<2x128xf32>,
    return
  }
  func.func @transform_0(%arg0: i32) -> (i32, i32, i32) {
    %c0_i32 = arith.constant 0 : i32
    %c0_i32_0 = arith.constant 0 : i32
    %c0_i32_1 = arith.constant 0 : i32
    return %arg0, %c0_i32, %c0_i32_0 : i32, i32, i32
  }
  func.func @transform_1(%arg0: i32) -> (i32, i32) {
    %c0_i32 = arith.constant 0 : i32
    %c0_i32_0 = arith.constant 0 : i32
    %c0_i32_1 = arith.constant 0 : i32
    return %c0_i32, %c0_i32_0 : i32, i32
  }
  func.func @transform_2(%arg0: i32) -> (i32, i32) {
    %c0_i32 = arith.constant 0 : i32
    %c0_i32_0 = arith.constant 0 : i32
    %c0_i32_1 = arith.constant 0 : i32
    return %c0_i32, %c0_i32_0 : i32, i32
  }
  func.func @transform_3(%arg0: i32) -> (i32, i32) {
    %c0_i32 = arith.constant 0 : i32
    %c0_i32_0 = arith.constant 0 : i32
    %c0_i32_1 = arith.constant 0 : i32
    return %c0_i32, %c0_i32_0 : i32, i32
  }
  func.func @transform_4(%arg0: i32) -> (i32, i32) {
    %c0_i32 = arith.constant 0 : i32
    %c0_i32_0 = arith.constant 0 : i32
    %c0_i32_1 = arith.constant 0 : i32
    return %c0_i32, %c0_i32_0 : i32, i32
  }
  func.func @transform_5(%arg0: i32) -> (i32, i32) {
    %c0_i32 = arith.constant 0 : i32
    %c0_i32_0 = arith.constant 0 : i32
    return %arg0, %c0_i32 : i32, i32
  }
}

</mosaic_0001>

<llo_original>
// kernel: tpu_custom_call.1
$region0: #{tpu_custom_call.1}
  #allocation0 [shape = 'u32[]', space=smem, size = 0x4, offset = 0x4, fixed_abs, tag = 'smem constant byte address 0x4 - core index']
  #allocation1 [shape = 'u32[144,128]{1,0:T(1,128)}', space=vmem, size = 0x12000, scoped, tag = 'internal scratch']
  %s0 = inlined_call_operand.hbm [shape: bf16[2,24,128], index: 0, kind: input, shape index: {}]
  %s1 = inlined_call_operand.hbm [shape: bf16[512,384], index: 1, kind: input, shape index: {}]
  %s2 = inlined_call_operand.vmem [shape: f32[1,384], index: 2, kind: input, shape index: {}]
  %s3 = inlined_call_operand.hbm [shape: f32[384,128], index: 3, kind: input, shape index: {}]
  %s4 = inlined_call_operand.vmem [shape: f32[1,128], index: 4, kind: input, shape index: {}]
  %s5 = inlined_call_operand.hbm [shape: f32[2,128], index: 5, kind: output, shape index: {}]
  %s6 = sld [smem:[#allocation0]]
  $region42: #{tpu_custom_call.1} parent=0
    _
  %s8 = ssub.s32 1, %s6
  %s9 = scalar_select 0, %s8, %s6
  $region1: #{tpu_custom_call.1} parent=0
    #allocation2 [shape = 'u8[12288]{0}', space=vmem, size = 0x3000, scoped, tag = 'input window, operand 0, single buffered']
    #allocation3 [shape = 's32[1]{0}', space=sflag, size = 0x4, scoped, tag = 'scoped memory for tpu_custom_call.1']
    #allocation4 [shape = 's32[1]{0}', space=sflag, size = 0x4, scoped, tag = 'scoped memory for tpu_custom_call.1']
    #allocation5 [shape = 'u8[393216]{0}', space=vmem, size = 0x60000, scoped, tag = 'input window, operand 1, single buffered']
    #allocation6 [shape = 's32[1]{0}', space=sflag, size = 0x4, scoped, tag = 'scoped memory for tpu_custom_call.1']
    #allocation7 [shape = 'u8[196608]{0}', space=vmem, size = 0x30000, scoped, tag = 'input window, operand 3, single buffered']
    #allocation8 [shape = 'u8[1024]{0}', space=vmem, size = 0x400, scoped, tag = 'output window, operand 0, single buffered']
    %10 = vsyncpa [#allocation3], 0
    %11 = vsyncpa [#allocation6], 0
    %12 = vsyncpa [#allocation4], 0
    // Predicated region
    $region2: #{tpu_custom_call.1} parent=1 // pred_check
      _
    $region3: #{tpu_custom_call.1} parent=1 // pred_check_branch
      %14 = sbr.rel (0) target = $region5
    $region4: #{tpu_custom_call.1} parent=1 // pred_region
      %s16 = ssub.s32 384, 384
      %17 = vsyncadd [#allocation3], %s16
      %s18 = sshll.u32 [#allocation2], 4
      %s19 = int_to_ptr.vmem [resolvable:$true] %s18
      %24 = dma.hbm_to_vmem [thread:$0]  %s0, 384, %s19, [#allocation3], 64, 64, 4
    $region5: #{tpu_custom_call.1} parent=1 // pred_fallthru
      _
    // Predicated region
    $region6: #{tpu_custom_call.1} parent=1 // pred_check
      _
    $region7: #{tpu_custom_call.1} parent=1 // pred_check_branch
      %26 = sbr.rel (0) target = $region9
    $region8: #{tpu_custom_call.1} parent=1 // pred_region
      %s28 = ssub.s32 12288, 12288
      %29 = vsyncadd [#allocation6], %s28
      %s30 = sshll.u32 [#allocation5], 4
      %s31 = int_to_ptr.vmem [resolvable:$true] %s30
      %36 = dma.hbm_to_vmem [thread:$0]  %s1, 12288, %s31, [#allocation6], 192, 192, 12
    $region9: #{tpu_custom_call.1} parent=1 // pred_fallthru
      _
    // Predicated region
    $region10: #{tpu_custom_call.1} parent=1 // pred_check
      _
    $region11: #{tpu_custom_call.1} parent=1 // pred_check_branch
      %38 = sbr.rel (0) target = $region13
    $region12: #{tpu_custom_call.1} parent=1 // pred_region
      _
    $region13: #{tpu_custom_call.1} parent=1 // pred_fallthru
      _
    // Predicated region
    $region14: #{tpu_custom_call.1} parent=1 // pred_check
      _
    $region15: #{tpu_custom_call.1} parent=1 // pred_check_branch
      %40 = sbr.rel (0) target = $region17
    $region16: #{tpu_custom_call.1} parent=1 // pred_region
      %s42 = ssub.s32 6144, 6144
      %43 = vsyncadd [#allocation6], %s42
      %s44 = sshll.u32 [#allocation7], 4
      %s45 = int_to_ptr.vmem [resolvable:$true] %s44
      %50 = dma.hbm_to_vmem [thread:$0]  %s3, 6144, %s45, [#allocation6], 128, 128, 8
    $region17: #{tpu_custom_call.1} parent=1 // pred_fallthru
      _
    // Predicated region
    $region18: #{tpu_custom_call.1} parent=1 // pred_check
      _
    $region19: #{tpu_custom_call.1} parent=1 // pred_check_branch
      %52 = sbr.rel (0) target = $region21
    $region20: #{tpu_custom_call.1} parent=1 // pred_region
      _
    $region21: #{tpu_custom_call.1} parent=1 // pred_fallthru
      _
    // Predicated region
    $region22: #{tpu_custom_call.1} parent=1 // pred_check
      _
    $region23: #{tpu_custom_call.1} parent=1 // pred_check_branch
      %54 = sbr.rel (0) target = $region25
    $region24: #{tpu_custom_call.1} parent=1 // pred_region
      %55 = dma.done [#allocation3], 384
    $region25: #{tpu_custom_call.1} parent=1 // pred_fallthru
      _
    // Predicated region
    $region26: #{tpu_custom_call.1} parent=1 // pred_check
      _
    $region27: #{tpu_custom_call.1} parent=1 // pred_check_branch
      %57 = sbr.rel (0) target = $region29
    $region28: #{tpu_custom_call.1} parent=1 // pred_region
      %58 = dma.done [#allocation6], 12288
    $region29: #{tpu_custom_call.1} parent=1 // pred_fallthru
      _
    // Predicated region
    $region30: #{tpu_custom_call.1} parent=1 // pred_check
      _
    $region31: #{tpu_custom_call.1} parent=1 // pred_check_branch
      %60 = sbr.rel (0) target = $region33
    $region32: #{tpu_custom_call.1} parent=1 // pred_region
      %61 = dma.done [#allocation6], 6144
    $region33: #{tpu_custom_call.1} parent=1 // pred_fallthru
      _
    %v63 = vld [vmem:[#allocation2] sm:$0xf]
    %v64 = vld [vmem:[#allocation2 + $0x4] sm:$0xf]
    %v65 = vld [vmem:[#allocation2 + $0x8] sm:$0xf]
    %v66 = vld [vmem:[#allocation2 + $0xc] sm:$0xf]
    %v67 = vld [vmem:[#allocation2 + $0x10] sm:$0xf]
    %v68 = vld [vmem:[#allocation2 + $0x14] sm:$0xf]
    %v73 = vunpack.c.l.b16 %v63
    %v74 = vunpack.c.l.b16 %v64
    %v75 = vunpack.c.l.b16 %v66
    %v76 = vunpack.c.l.b16 %v67
    %v77 = vpack.c.b16 %v74, %v73
    %v78 = vpack.c.b16 %v76, %v75
    %v83 = vunpack.c.l.b16 %v65
    %v84 = vunpack.c.l.b16 %v68
    %v85 = vpack.c.b16 %v83, %v83
    %v86 = vpack.c.b16 %v84, %v84
    %vm87 = vsmask.f32 7424
    %v89 = vshrl.u32 %v77, 16
    %v91 = vshll.u32 %v77, 16
    %v93 = vrot.slane %v91, 1
    %v94 = vor.u32 %v89, %v93
    %v96 = vshll.u32 %v85, 16
    %v98 = vrot.slane %v96, 1
    %v99 = vsel %vm87, %v94, %v98
    %v101 = vshrl.u32 %v78, 16
    %v103 = vshll.u32 %v78, 16
    %v105 = vrot.slane %v103, 1
    %v106 = vor.u32 %v101, %v105
    %v108 = vshll.u32 %v86, 16
    %v110 = vrot.slane %v108, 1
    %v111 = vsel %vm87, %v106, %v110
    %vm114 = vcmask 1046528
    %v115 = vrot.slane %v77, 1
    %v116 = vrot.slane %v85, 1
    %v117 = vsel %vm114, %v115, %v116
    %v118 = vrot.slane %v78, 1
    %v119 = vrot.slane %v86, 1
    %v120 = vsel %vm114, %v118, %v119
    %vm123 = vsmask.f32 6400
    %v124 = vrot.slane %v89, 1
    %v125 = vrot.slane %v91, 2
    %v126 = vor.u32 %v124, %v125
    %v127 = vshrl.u32 %v85, 16
    %v129 = vrot.slane %v127, 1
    %v130 = vrot.slane %v96, 2
    %v131 = vor.u32 %v129, %v130
    %v132 = vsel %vm123, %v126, %v131
    %v133 = vrot.slane %v101, 1
    %v134 = vrot.slane %v103, 2
    %v135 = vor.u32 %v133, %v134
    %v136 = vshrl.u32 %v86, 16
    %v138 = vrot.slane %v136, 1
    %v139 = vrot.slane %v108, 2
    %v140 = vor.u32 %v138, %v139
    %v141 = vsel %vm123, %v135, %v140
    %v144 = vld [vmem:[#allocation5] sm:$0xff]
    %v145 = vld [vmem:[#allocation5 + $0x8] sm:$0xf]
    %v146 = vld [vmem:[#allocation5 + $0xc] sm:$0xff]
    %v147 = vld [vmem:[#allocation5 + $0x14] sm:$0xf]
    %v148 = vld [vmem:[#allocation5 + $0x18] sm:$0xff]
    %v149 = vld [vmem:[#allocation5 + $0x20] sm:$0xf]
    %v150 = vld [vmem:[#allocation5 + $0x24] sm:$0xff]
    %v151 = vld [vmem:[#allocation5 + $0x2c] sm:$0xf]
    %v152 = vld [vmem:[#allocation5 + $0x30] sm:$0xff]
    %v153 = vld [vmem:[#allocation5 + $0x38] sm:$0xf]
    %v154 = vld [vmem:[#allocation5 + $0x3c] sm:$0xff]
    %v155 = vld [vmem:[#allocation5 + $0x44] sm:$0xf]
    %v156 = vld [vmem:[#allocation5 + $0x48] sm:$0xff]
    %v157 = vld [vmem:[#allocation5 + $0x50] sm:$0xf]
    %v158 = vld [vmem:[#allocation5 + $0x54] sm:$0xff]
    %v159 = vld [vmem:[#allocation5 + $0x5c] sm:$0xf]
    %v160 = vld [vmem:[#allocation5 + $0x60] sm:$0xff]
    %v161 = vld [vmem:[#allocation5 + $0x68] sm:$0xf]
    %v162 = vld [vmem:[#allocation5 + $0x6c] sm:$0xff]
    %v163 = vld [vmem:[#allocation5 + $0x74] sm:$0xf]
    %v164 = vld [vmem:[#allocation5 + $0x78] sm:$0xff]
    %v165 = vld [vmem:[#allocation5 + $0x80] sm:$0xf]
    %v166 = vld [vmem:[#allocation5 + $0x84] sm:$0xff]
    %v167 = vld [vmem:[#allocation5 + $0x8c] sm:$0xf]
    %v168 = vld [vmem:[#allocation5 + $0x90] sm:$0xff]
    %v169 = vld [vmem:[#allocation5 + $0x98] sm:$0xf]
    %v170 = vld [vmem:[#allocation5 + $0x9c] sm:$0xff]
    %v171 = vld [vmem:[#allocation5 + $0xa4] sm:$0xf]
    %v172 = vld [vmem:[#allocation5 + $0xa8] sm:$0xff]
    %v173 = vld [vmem:[#allocation5 + $0xb0] sm:$0xf]
    %v174 = vld [vmem:[#allocation5 + $0xb4] sm:$0xff]
    %v175 = vld [vmem:[#allocation5 + $0xbc] sm:$0xf]
    %v176 = vld [vmem:[#allocation5 + $0xc0] sm:$0xff]
    %v177 = vld [vmem:[#allocation5 + $0xc8] sm:$0xf]
    %v178 = vld [vmem:[#allocation5 + $0xcc] sm:$0xff]
    %v179 = vld [vmem:[#allocation5 + $0xd4] sm:$0xf]
    %v180 = vld [vmem:[#allocation5 + $0xd8] sm:$0xff]
    %v181 = vld [vmem:[#allocation5 + $0xe0] sm:$0xf]
    %v182 = vld [vmem:[#allocation5 + $0xe4] sm:$0xff]
    %v183 = vld [vmem:[#allocation5 + $0xec] sm:$0xf]
    %v184 = vld [vmem:[#allocation5 + $0xf0] sm:$0xff]
    %v185 = vld [vmem:[#allocation5 + $0xf8] sm:$0xf]
    %v186 = vld [vmem:[#allocation5 + $0xfc] sm:$0xff]
    %v187 = vld [vmem:[#allocation5 + $0x104] sm:$0xf]
    %v188 = vld [vmem:[#allocation5 + $0x108] sm:$0xff]
    %v189 = vld [vmem:[#allocation5 + $0x110] sm:$0xf]
    %v190 = vld [vmem:[#allocation5 + $0x114] sm:$0xff]
    %v191 = vld [vmem:[#allocation5 + $0x11c] sm:$0xf]
    %v192 = vld [vmem:[#allocation5 + $0x120] sm:$0xff]
    %v193 = vld [vmem:[#allocation5 + $0x128] sm:$0xf]
    %v194 = vld [vmem:[#allocation5 + $0x12c] sm:$0xff]
    %v195 = vld [vmem:[#allocation5 + $0x134] sm:$0xf]
    %v196 = vld [vmem:[#allocation5 + $0x138] sm:$0xff]
    %v197 = vld [vmem:[#allocation5 + $0x140] sm:$0xf]
    %v198 = vld [vmem:[#allocation5 + $0x144] sm:$0xff]
    %v199 = vld [vmem:[#allocation5 + $0x14c] sm:$0xf]
    %v200 = vld [vmem:[#allocation5 + $0x150] sm:$0xff]
    %v201 = vld [vmem:[#allocation5 + $0x158] sm:$0xf]
    %v202 = vld [vmem:[#allocation5 + $0x15c] sm:$0xff]
    %v203 = vld [vmem:[#allocation5 + $0x164] sm:$0xf]
    %v204 = vld [vmem:[#allocation5 + $0x168] sm:$0xff]
    %v205 = vld [vmem:[#allocation5 + $0x170] sm:$0xf]
    %v206 = vld [vmem:[#allocation5 + $0x174] sm:$0xff]
    %v207 = vld [vmem:[#allocation5 + $0x17c] sm:$0xf]
    %v208 = vld [vmem:[#allocation5 + $0x180] sm:$0xff]
    %v209 = vld [vmem:[#allocation5 + $0x188] sm:$0xf]
    %v210 = vld [vmem:[#allocation5 + $0x18c] sm:$0xff]
    %v211 = vld [vmem:[#allocation5 + $0x194] sm:$0xf]
    %v212 = vld [vmem:[#allocation5 + $0x198] sm:$0xff]
    %v213 = vld [vmem:[#allocation5 + $0x1a0] sm:$0xf]
    %v214 = vld [vmem:[#allocation5 + $0x1a4] sm:$0xff]
    %v215 = vld [vmem:[#allocation5 + $0x1ac] sm:$0xf]
    %v216 = vld [vmem:[#allocation5 + $0x1b0] sm:$0xff]
    %v217 = vld [vmem:[#allocation5 + $0x1b8] sm:$0xf]
    %v218 = vld [vmem:[#allocation5 + $0x1bc] sm:$0xff]
    %v219 = vld [vmem:[#allocation5 + $0x1c4] sm:$0xf]
    %v220 = vld [vmem:[#allocation5 + $0x1c8] sm:$0xff]
    %v221 = vld [vmem:[#allocation5 + $0x1d0] sm:$0xf]
    %v222 = vld [vmem:[#allocation5 + $0x1d4] sm:$0xff]
    %v223 = vld [vmem:[#allocation5 + $0x1dc] sm:$0xf]
    %v224 = vld [vmem:[#allocation5 + $0x1e0] sm:$0xff]
    %v225 = vld [vmem:[#allocation5 + $0x1e8] sm:$0xf]
    %v226 = vld [vmem:[#allocation5 + $0x1ec] sm:$0xff]
    %v227 = vld [vmem:[#allocation5 + $0x1f4] sm:$0xf]
    %v228 = vld [vmem:[#allocation5 + $0x1f8] sm:$0xff]
    %v229 = vld [vmem:[#allocation5 + $0x200] sm:$0xf]
    %v230 = vld [vmem:[#allocation5 + $0x204] sm:$0xff]
    %v231 = vld [vmem:[#allocation5 + $0x20c] sm:$0xf]
    %v232 = vld [vmem:[#allocation5 + $0x210] sm:$0xff]
    %v233 = vld [vmem:[#allocation5 + $0x218] sm:$0xf]
    %v234 = vld [vmem:[#allocation5 + $0x21c] sm:$0xff]
    %v235 = vld [vmem:[#allocation5 + $0x224] sm:$0xf]
    %v236 = vld [vmem:[#allocation5 + $0x228] sm:$0xff]
    %v237 = vld [vmem:[#allocation5 + $0x230] sm:$0xf]
    %v238 = vld [vmem:[#allocation5 + $0x234] sm:$0xff]
    %v239 = vld [vmem:[#allocation5 + $0x23c] sm:$0xf]
    %v240 = vld [vmem:[#allocation5 + $0x240] sm:$0xff]
    %v241 = vld [vmem:[#allocation5 + $0x248] sm:$0xf]
    %v242 = vld [vmem:[#allocation5 + $0x24c] sm:$0xff]
    %v243 = vld [vmem:[#allocation5 + $0x254] sm:$0xf]
    %v244 = vld [vmem:[#allocation5 + $0x258] sm:$0xff]
    %v245 = vld [vmem:[#allocation5 + $0x260] sm:$0xf]
    %v246 = vld [vmem:[#allocation5 + $0x264] sm:$0xff]
    %v247 = vld [vmem:[#allocation5 + $0x26c] sm:$0xf]
    %v248 = vld [vmem:[#allocation5 + $0x270] sm:$0xff]
    %v249 = vld [vmem:[#allocation5 + $0x278] sm:$0xf]
    %v250 = vld [vmem:[#allocation5 + $0x27c] sm:$0xff]
    %v251 = vld [vmem:[#allocation5 + $0x284] sm:$0xf]
    %v252 = vld [vmem:[#allocation5 + $0x288] sm:$0xff]
    %v253 = vld [vmem:[#allocation5 + $0x290] sm:$0xf]
    %v254 = vld [vmem:[#allocation5 + $0x294] sm:$0xff]
    %v255 = vld [vmem:[#allocation5 + $0x29c] sm:$0xf]
    %v256 = vld [vmem:[#allocation5 + $0x2a0] sm:$0xff]
    %v257 = vld [vmem:[#allocation5 + $0x2a8] sm:$0xf]
    %v258 = vld [vmem:[#allocation5 + $0x2ac] sm:$0xff]
    %v259 = vld [vmem:[#allocation5 + $0x2b4] sm:$0xf]
    %v260 = vld [vmem:[#allocation5 + $0x2b8] sm:$0xff]
    %v261 = vld [vmem:[#allocation5 + $0x2c0] sm:$0xf]
    %v262 = vld [vmem:[#allocation5 + $0x2c4] sm:$0xff]
    %v263 = vld [vmem:[#allocation5 + $0x2cc] sm:$0xf]
    %v264 = vld [vmem:[#allocation5 + $0x2d0] sm:$0xff]
    %v265 = vld [vmem:[#allocation5 + $0x2d8] sm:$0xf]
    %v266 = vld [vmem:[#allocation5 + $0x2dc] sm:$0xff]
    %v267 = vld [vmem:[#allocation5 + $0x2e4] sm:$0xf]
    %v268 = vld [vmem:[#allocation5 + $0x2e8] sm:$0xff]
    %v269 = vld [vmem:[#allocation5 + $0x2f0] sm:$0xf]
    %v270 = vld [vmem:[#allocation5 + $0x2f4] sm:$0xff]
    %v271 = vld [vmem:[#allocation5 + $0x2fc] sm:$0xf]
    %v400 = vunpack.c.l.b16 %v144
    %v401 = vunpack.c.h.b16 %v144
    %v402 = vunpack.c.l.b16 %v145
    %v403 = vunpack.c.l.b16 %v146
    %v404 = vunpack.c.h.b16 %v146
    %v405 = vunpack.c.l.b16 %v147
    %v406 = vunpack.c.l.b16 %v148
    %v407 = vunpack.c.h.b16 %v148
    %v408 = vunpack.c.l.b16 %v149
    %v409 = vunpack.c.l.b16 %v150
    %v410 = vunpack.c.h.b16 %v150
    %v411 = vunpack.c.l.b16 %v151
    %v412 = vunpack.c.l.b16 %v152
    %v413 = vunpack.c.h.b16 %v152
    %v414 = vunpack.c.l.b16 %v153
    %v415 = vunpack.c.l.b16 %v154
    %v416 = vunpack.c.h.b16 %v154
    %v417 = vunpack.c.l.b16 %v155
    %v418 = vunpack.c.l.b16 %v156
    %v419 = vunpack.c.h.b16 %v156
    %v420 = vunpack.c.l.b16 %v157
    %v421 = vunpack.c.l.b16 %v158
    %v422 = vunpack.c.h.b16 %v158
    %v423 = vunpack.c.l.b16 %v159
    %v424 = vunpack.c.l.b16 %v160
    %v425 = vunpack.c.h.b16 %v160
    %v426 = vunpack.c.l.b16 %v161
    %v427 = vunpack.c.l.b16 %v162
    %v428 = vunpack.c.h.b16 %v162
    %v429 = vunpack.c.l.b16 %v163
    %v430 = vunpack.c.l.b16 %v164
    %v431 = vunpack.c.h.b16 %v164
    %v432 = vunpack.c.l.b16 %v165
    %v433 = vunpack.c.l.b16 %v166
    %v434 = vunpack.c.h.b16 %v166
    %v435 = vunpack.c.l.b16 %v167
    %v436 = vunpack.c.l.b16 %v168
    %v437 = vunpack.c.h.b16 %v168
    %v438 = vunpack.c.l.b16 %v169
    %v439 = vunpack.c.l.b16 %v170
    %v440 = vunpack.c.h.b16 %v170
    %v441 = vunpack.c.l.b16 %v171
    %v442 = vunpack.c.l.b16 %v172
    %v443 = vunpack.c.h.b16 %v172
    %v444 = vunpack.c.l.b16 %v173
    %v445 = vunpack.c.l.b16 %v174
    %v446 = vunpack.c.h.b16 %v174
    %v447 = vunpack.c.l.b16 %v175
    %v448 = vunpack.c.l.b16 %v176
    %v449 = vunpack.c.h.b16 %v176
    %v450 = vunpack.c.l.b16 %v177
    %v451 = vunpack.c.l.b16 %v178
    %v452 = vunpack.c.h.b16 %v178
    %v453 = vunpack.c.l.b16 %v179
    %v454 = vunpack.c.l.b16 %v180
    %v455 = vunpack.c.h.b16 %v180
    %v456 = vunpack.c.l.b16 %v181
    %v457 = vunpack.c.l.b16 %v182
    %v458 = vunpack.c.h.b16 %v182
    %v459 = vunpack.c.l.b16 %v183
    %v460 = vunpack.c.l.b16 %v184
    %v461 = vunpack.c.h.b16 %v184
    %v462 = vunpack.c.l.b16 %v185
    %v463 = vunpack.c.l.b16 %v186
    %v464 = vunpack.c.h.b16 %v186
    %v465 = vunpack.c.l.b16 %v187
    %v466 = vunpack.c.l.b16 %v188
    %v467 = vunpack.c.h.b16 %v188
    %v468 = vunpack.c.l.b16 %v189
    %v469 = vunpack.c.l.b16 %v190
    %v470 = vunpack.c.h.b16 %v190
    %v471 = vunpack.c.l.b16 %v191
    %v472 = vunpack.c.l.b16 %v192
    %v473 = vunpack.c.h.b16 %v192
    %v474 = vunpack.c.l.b16 %v193
    %v475 = vunpack.c.l.b16 %v194
    %v476 = vunpack.c.h.b16 %v194
    %v477 = vunpack.c.l.b16 %v195
    %v478 = vunpack.c.l.b16 %v196
    %v479 = vunpack.c.h.b16 %v196
    %v480 = vunpack.c.l.b16 %v197
    %v481 = vunpack.c.l.b16 %v198
    %v482 = vunpack.c.h.b16 %v198
    %v483 = vunpack.c.l.b16 %v199
    %v484 = vunpack.c.l.b16 %v200
    %v485 = vunpack.c.h.b16 %v200
    %v486 = vunpack.c.l.b16 %v201
    %v487 = vunpack.c.l.b16 %v202
    %v488 = vunpack.c.h.b16 %v202
    %v489 = vunpack.c.l.b16 %v203
    %v490 = vunpack.c.l.b16 %v204
    %v491 = vunpack.c.h.b16 %v204
    %v492 = vunpack.c.l.b16 %v205
    %v493 = vunpack.c.l.b16 %v206
    %v494 = vunpack.c.h.b16 %v206
    %v495 = vunpack.c.l.b16 %v207
    %v496 = vunpack.c.l.b16 %v208
    %v497 = vunpack.c.h.b16 %v208
    %v498 = vunpack.c.l.b16 %v209
    %v499 = vunpack.c.l.b16 %v210
    %v500 = vunpack.c.h.b16 %v210
    %v501 = vunpack.c.l.b16 %v211
    %v502 = vunpack.c.l.b16 %v212
    %v503 = vunpack.c.h.b16 %v212
    %v504 = vunpack.c.l.b16 %v213
    %v505 = vunpack.c.l.b16 %v214
    %v506 = vunpack.c.h.b16 %v214
    %v507 = vunpack.c.l.b16 %v215
    %v508 = vunpack.c.l.b16 %v216
    %v509 = vunpack.c.h.b16 %v216
    %v510 = vunpack.c.l.b16 %v217
    %v511 = vunpack.c.l.b16 %v218
    %v512 = vunpack.c.h.b16 %v218
    %v513 = vunpack.c.l.b16 %v219
    %v514 = vunpack.c.l.b16 %v220
    %v515 = vunpack.c.h.b16 %v220
    %v516 = vunpack.c.l.b16 %v221
    %v517 = vunpack.c.l.b16 %v222
    %v518 = vunpack.c.h.b16 %v222
    %v519 = vunpack.c.l.b16 %v223
    %v520 = vunpack.c.l.b16 %v224
    %v521 = vunpack.c.h.b16 %v224
    %v522 = vunpack.c.l.b16 %v225
    %v523 = vunpack.c.l.b16 %v226
    %v524 = vunpack.c.h.b16 %v226
    %v525 = vunpack.c.l.b16 %v227
    %v526 = vunpack.c.l.b16 %v228
    %v527 = vunpack.c.h.b16 %v228
    %v528 = vunpack.c.l.b16 %v229
    %v529 = vunpack.c.l.b16 %v230
    %v530 = vunpack.c.h.b16 %v230
    %v531 = vunpack.c.l.b16 %v231
    %v532 = vunpack.c.l.b16 %v232
    %v533 = vunpack.c.h.b16 %v232
    %v534 = vunpack.c.l.b16 %v233
    %v535 = vunpack.c.l.b16 %v234
    %v536 = vunpack.c.h.b16 %v234
    %v537 = vunpack.c.l.b16 %v235
    %v538 = vunpack.c.l.b16 %v236
    %v539 = vunpack.c.h.b16 %v236
    %v540 = vunpack.c.l.b16 %v237
    %v541 = vunpack.c.l.b16 %v238
    %v542 = vunpack.c.h.b16 %v238
    %v543 = vunpack.c.l.b16 %v239
    %v544 = vunpack.c.l.b16 %v240
    %v545 = vunpack.c.h.b16 %v240
    %v546 = vunpack.c.l.b16 %v241
    %v547 = vunpack.c.l.b16 %v242
    %v548 = vunpack.c.h.b16 %v242
    %v549 = vunpack.c.l.b16 %v243
    %v550 = vunpack.c.l.b16 %v244
    %v551 = vunpack.c.h.b16 %v244
    %v552 = vunpack.c.l.b16 %v245
    %v553 = vunpack.c.l.b16 %v246
    %v554 = vunpack.c.h.b16 %v246
    %v555 = vunpack.c.l.b16 %v247
    %v556 = vunpack.c.l.b16 %v248
    %v557 = vunpack.c.h.b16 %v248
    %v558 = vunpack.c.l.b16 %v249
    %v559 = vunpack.c.l.b16 %v250
    %v560 = vunpack.c.h.b16 %v250
    %v561 = vunpack.c.l.b16 %v251
    %v562 = vunpack.c.l.b16 %v252
    %v563 = vunpack.c.h.b16 %v252
    %v564 = vunpack.c.l.b16 %v253
    %v565 = vunpack.c.l.b16 %v254
    %v566 = vunpack.c.h.b16 %v254
    %v567 = vunpack.c.l.b16 %v255
    %v568 = vunpack.c.l.b16 %v256
    %v569 = vunpack.c.h.b16 %v256
    %v570 = vunpack.c.l.b16 %v257
    %v571 = vunpack.c.l.b16 %v258
    %v572 = vunpack.c.h.b16 %v258
    %v573 = vunpack.c.l.b16 %v259
    %v574 = vunpack.c.l.b16 %v260
    %v575 = vunpack.c.h.b16 %v260
    %v576 = vunpack.c.l.b16 %v261
    %v577 = vunpack.c.l.b16 %v262
    %v578 = vunpack.c.h.b16 %v262
    %v579 = vunpack.c.l.b16 %v263
    %v580 = vunpack.c.l.b16 %v264
    %v581 = vunpack.c.h.b16 %v264
    %v582 = vunpack.c.l.b16 %v265
    %v583 = vunpack.c.l.b16 %v266
    %v584 = vunpack.c.h.b16 %v266
    %v585 = vunpack.c.l.b16 %v267
    %v586 = vunpack.c.l.b16 %v268
    %v587 = vunpack.c.h.b16 %v268
    %v588 = vunpack.c.l.b16 %v269
    %v589 = vunpack.c.l.b16 %v270
    %v590 = vunpack.c.h.b16 %v270
    %v591 = vunpack.c.l.b16 %v271
    %v592 = vpack.c.b16 %v403, %v400
    %v593 = vpack.c.b16 %v404, %v401
    %v594 = vpack.c.b16 %v405, %v402
    %v595 = vpack.c.b16 %v409, %v406
    %v596 = vpack.c.b16 %v410, %v407
    %v597 = vpack.c.b16 %v411, %v408
    %v598 = vpack.c.b16 %v415, %v412
    %v599 = vpack.c.b16 %v416, %v413
    %v600 = vpack.c.b16 %v417, %v414
    %v601 = vpack.c.b16 %v421, %v418
    %v602 = vpack.c.b16 %v422, %v419
    %v603 = vpack.c.b16 %v423, %v420
    %v604 = vpack.c.b16 %v427, %v424
    %v605 = vpack.c.b16 %v428, %v425
    %v606 = vpack.c.b16 %v429, %v426
    %v607 = vpack.c.b16 %v433, %v430
    %v608 = vpack.c.b16 %v434, %v431
    %v609 = vpack.c.b16 %v435, %v432
    %v610 = vpack.c.b16 %v439, %v436
    %v611 = vpack.c.b16 %v440, %v437
    %v612 = vpack.c.b16 %v441, %v438
    %v613 = vpack.c.b16 %v445, %v442
    %v614 = vpack.c.b16 %v446, %v443
    %v615 = vpack.c.b16 %v447, %v444
    %v616 = vpack.c.b16 %v451, %v448
    %v617 = vpack.c.b16 %v452, %v449
    %v618 = vpack.c.b16 %v453, %v450
    %v619 = vpack.c.b16 %v457, %v454
    %v620 = vpack.c.b16 %v458, %v455
    %v621 = vpack.c.b16 %v459, %v456
    %v622 = vpack.c.b16 %v463, %v460
    %v623 = vpack.c.b16 %v464, %v461
    %v624 = vpack.c.b16 %v465, %v462
    %v625 = vpack.c.b16 %v469, %v466
    %v626 = vpack.c.b16 %v470, %v467
    %v627 = vpack.c.b16 %v471, %v468
    %v628 = vpack.c.b16 %v475, %v472
    %v629 = vpack.c.b16 %v476, %v473
    %v630 = vpack.c.b16 %v477, %v474
    %v631 = vpack.c.b16 %v481, %v478
    %v632 = vpack.c.b16 %v482, %v479
    %v633 = vpack.c.b16 %v483, %v480
    %v634 = vpack.c.b16 %v487, %v484
    %v635 = vpack.c.b16 %v488, %v485
    %v636 = vpack.c.b16 %v489, %v486
    %v637 = vpack.c.b16 %v493, %v490
    %v638 = vpack.c.b16 %v494, %v491
    %v639 = vpack.c.b16 %v495, %v492
    %v640 = vpack.c.b16 %v499, %v496
    %v641 = vpack.c.b16 %v500, %v497
    %v642 = vpack.c.b16 %v501, %v498
    %v643 = vpack.c.b16 %v505, %v502
    %v644 = vpack.c.b16 %v506, %v503
    %v645 = vpack.c.b16 %v507, %v504
    %v646 = vpack.c.b16 %v511, %v508
    %v647 = vpack.c.b16 %v512, %v509
    %v648 = vpack.c.b16 %v513, %v510
    %v649 = vpack.c.b16 %v517, %v514
    %v650 = vpack.c.b16 %v518, %v515
    %v651 = vpack.c.b16 %v519, %v516
    %v652 = vpack.c.b16 %v523, %v520
    %v653 = vpack.c.b16 %v524, %v521
    %v654 = vpack.c.b16 %v525, %v522
    %v655 = vpack.c.b16 %v529, %v526
    %v656 = vpack.c.b16 %v530, %v527
    %v657 = vpack.c.b16 %v531, %v528
    %v658 = vpack.c.b16 %v535, %v532
    %v659 = vpack.c.b16 %v536, %v533
    %v660 = vpack.c.b16 %v537, %v534
    %v661 = vpack.c.b16 %v541, %v538
    %v662 = vpack.c.b16 %v542, %v539
    %v663 = vpack.c.b16 %v543, %v540
    %v664 = vpack.c.b16 %v547, %v544
    %v665 = vpack.c.b16 %v548, %v545
    %v666 = vpack.c.b16 %v549, %v546
    %v667 = vpack.c.b16 %v553, %v550
    %v668 = vpack.c.b16 %v554, %v551
    %v669 = vpack.c.b16 %v555, %v552
    %v670 = vpack.c.b16 %v559, %v556
    %v671 = vpack.c.b16 %v560, %v557
    %v672 = vpack.c.b16 %v561, %v558
    %v673 = vpack.c.b16 %v565, %v562
    %v674 = vpack.c.b16 %v566, %v563
    %v675 = vpack.c.b16 %v567, %v564
    %v676 = vpack.c.b16 %v571, %v568
    %v677 = vpack.c.b16 %v572, %v569
    %v678 = vpack.c.b16 %v573, %v570
    %v679 = vpack.c.b16 %v577, %v574
    %v680 = vpack.c.b16 %v578, %v575
    %v681 = vpack.c.b16 %v579, %v576
    %v682 = vpack.c.b16 %v583, %v580
    %v683 = vpack.c.b16 %v584, %v581
    %v684 = vpack.c.b16 %v585, %v582
    %v685 = vpack.c.b16 %v589, %v586
    %v686 = vpack.c.b16 %v590, %v587
    %v687 = vpack.c.b16 %v591, %v588
    %784 = vmatprep.subr.bf16.mxu0 %v593
    %785 = vmatpush1.bf16.msra.mxu0 %v592
    %786 = vmatprep.subr.bf16.mxu0 %v596
    %787 = vmatpush1.bf16.msra.mxu0 %v595
    %788 = vmatprep.subr.bf16.mxu0 %v599
    %789 = vmatpush1.bf16.msra.mxu0 %v598
    %790 = vmatprep.subr.bf16.mxu0 %v602
    %791 = vmatpush1.bf16.msra.mxu0 %v601
    %792 = vmatprep.subr.bf16.mxu0 %v605
    %793 = vmatpush1.bf16.msra.mxu0 %v604
    %794 = vmatprep.subr.bf16.mxu0 %v608
    %795 = vmatpush1.bf16.msra.mxu0 %v607
    %796 = vmatprep.subr.bf16.mxu0 %v611
    %797 = vmatpush1.bf16.msra.mxu0 %v610
    %798 = vmatprep.subr.bf16.mxu0 %v614
    %799 = vmatpush1.bf16.msra.mxu0 %v613
    %800 = vmatprep.subr.bf16.mxu0 %v617
    %801 = vmatpush1.bf16.msra.mxu0 %v616
    %802 = vmatprep.subr.bf16.mxu0 %v620
    %803 = vmatpush1.bf16.msra.mxu0 %v619
    %804 = vmatprep.subr.bf16.mxu0 %v623
    %805 = vmatpush1.bf16.msra.mxu0 %v622
    %806 = vmatprep.subr.bf16.mxu0 %v626
    %807 = vmatpush1.bf16.msra.mxu0 %v625
    %808 = vmatprep.subr.bf16.mxu0 %v629
    %809 = vmatpush1.bf16.msra.mxu0 %v628
    %810 = vmatprep.subr.bf16.mxu0 %v632
    %811 = vmatpush1.bf16.msra.mxu0 %v631
    %812 = vmatprep.subr.bf16.mxu0 %v635
    %813 = vmatpush1.bf16.msra.mxu0 %v634
    %814 = vmatprep.subr.bf16.mxu0 %v638
    %815 = vmatpush1.bf16.msra.mxu0 %v637
    %816 = vmatprep.mubr.bf16.mxu0 %v99
    %817 = vmatmul.mubr.bf16.gmra.mrb[0].mxu0 %v77
    %v818 = vpop.f32.mrb[0].mxu0
    %v819 = vadd.f32 0.0, %v818
    %v820 = vpop.f32.mrb[0].mxu0
    %v821 = vadd.f32 0.0, %v820
    %v822 = vpop.f32.mrb[0].mxu0
    %v823 = vadd.f32 0.0, %v822
    %v824 = vpop.f32.mrb[0].mxu0
    %v825 = vadd.f32 0.0, %v824
    %826 = vmatprep.mubr.bf16.mxu0 %v111
    %827 = vmatmul.mubr.bf16.gmra.mrb[0].mxu0 %v78
    %v828 = vpop.f32.mrb[0].mxu0
    %v829 = vadd.f32 0.0, %v828
    %v830 = vpop.f32.mrb[0].mxu0
    %v831 = vadd.f32 0.0, %v830
    %v832 = vpop.f32.mrb[0].mxu0
    %v833 = vadd.f32 0.0, %v832
    %v834 = vpop.f32.mrb[0].mxu0
    %v835 = vadd.f32 0.0, %v834
    %836 = vdwg.mxu0
    %837 = vmatprep.subr.bf16.mxu0 %v641
    %838 = vmatpush1.bf16.msra.mxu0 %v640
    %839 = vmatprep.subr.bf16.mxu0 %v644
    %840 = vmatpush1.bf16.msra.mxu0 %v643
    %841 = vmatprep.subr.bf16.mxu0 %v647
    %842 = vmatpush1.bf16.msra.mxu0 %v646
    %843 = vmatprep.subr.bf16.mxu0 %v650
    %844 = vmatpush1.bf16.msra.mxu0 %v649
    %845 = vmatprep.subr.bf16.mxu0 %v653
    %846 = vmatpush1.bf16.msra.mxu0 %v652
    %847 = vmatprep.subr.bf16.mxu0 %v656
    %848 = vmatpush1.bf16.msra.mxu0 %v655
    %849 = vmatprep.subr.bf16.mxu0 %v659
    %850 = vmatpush1.bf16.msra.mxu0 %v658
    %851 = vmatprep.subr.bf16.mxu0 %v662
    %852 = vmatpush1.bf16.msra.mxu0 %v661
    %853 = vmatprep.subr.bf16.mxu0 %v665
    %854 = vmatpush1.bf16.msra.mxu0 %v664
    %855 = vmatprep.subr.bf16.mxu0 %v668
    %856 = vmatpush1.bf16.msra.mxu0 %v667
    %857 = vmatprep.subr.bf16.mxu0 %v671
    %858 = vmatpush1.bf16.msra.mxu0 %v670
    %859 = vmatprep.subr.bf16.mxu0 %v674
    %860 = vmatpush1.bf16.msra.mxu0 %v673
    %861 = vmatprep.subr.bf16.mxu0 %v677
    %862 = vmatpush1.bf16.msra.mxu0 %v676
    %863 = vmatprep.subr.bf16.mxu0 %v680
    %864 = vmatpush1.bf16.msra.mxu0 %v679
    %865 = vmatprep.subr.bf16.mxu0 %v683
    %866 = vmatpush1.bf16.msra.mxu0 %v682
    %867 = vmatprep.subr.bf16.mxu0 %v686
    %868 = vmatpush1.bf16.msra.mxu0 %v685
    %869 = vmatprep.mubr.bf16.mxu0 %v132
    %870 = vmatmul.mubr.bf16.gmra.mrb[0].mxu0 %v117
    %v871 = vpop.f32.mrb[0].mxu0
    %v872 = vadd.f32 %v819, %v871
    %v873 = vpop.f32.mrb[0].mxu0
    %v874 = vadd.f32 %v821, %v873
    %v875 = vpop.f32.mrb[0].mxu0
    %v876 = vadd.f32 %v823, %v875
    %v877 = vpop.f32.mrb[0].mxu0
    %v878 = vadd.f32 %v825, %v877
    %879 = vmatprep.mubr.bf16.mxu0 %v141
    %880 = vmatmul.mubr.bf16.gmra.mrb[0].mxu0 %v120
    %v881 = vpop.f32.mrb[0].mxu0
    %v882 = vadd.f32 %v829, %v881
    %v883 = vpop.f32.mrb[0].mxu0
    %v884 = vadd.f32 %v831, %v883
    %v885 = vpop.f32.mrb[0].mxu0
    %v886 = vadd.f32 %v833, %v885
    %v887 = vpop.f32.mrb[0].mxu0
    %v888 = vadd.f32 %v835, %v887
    %889 = vdwg.mxu0
    %890 = vmatprep.subr.bf16.mxu0 0
    %891 = vmatpush1.bf16.msra.mxu0 %v594
    %892 = vmatprep.subr.bf16.mxu0 0
    %893 = vmatpush1.bf16.msra.mxu0 %v597
    %894 = vmatprep.subr.bf16.mxu0 0
    %895 = vmatpush1.bf16.msra.mxu0 %v600
    %896 = vmatprep.subr.bf16.mxu0 0
    %897 = vmatpush1.bf16.msra.mxu0 %v603
    %898 = vmatprep.subr.bf16.mxu0 0
    %899 = vmatpush1.bf16.msra.mxu0 %v606
    %900 = vmatprep.subr.bf16.mxu0 0
    %901 = vmatpush1.bf16.msra.mxu0 %v609
    %902 = vmatprep.subr.bf16.mxu0 0
    %903 = vmatpush1.bf16.msra.mxu0 %v612
    %904 = vmatprep.subr.bf16.mxu0 0
    %905 = vmatpush1.bf16.msra.mxu0 %v615
    %906 = vmatprep.subr.bf16.mxu0 0
    %907 = vmatpush1.bf16.msra.mxu0 %v618
    %908 = vmatprep.subr.bf16.mxu0 0
    %909 = vmatpush1.bf16.msra.mxu0 %v621
    %910 = vmatprep.subr.bf16.mxu0 0
    %911 = vmatpush1.bf16.msra.mxu0 %v624
    %912 = vmatprep.subr.bf16.mxu0 0
    %913 = vmatpush1.bf16.msra.mxu0 %v627
    %914 = vmatprep.subr.bf16.mxu0 0
    %915 = vmatpush1.bf16.msra.mxu0 %v630
    %916 = vmatprep.subr.bf16.mxu0 0
    %917 = vmatpush1.bf16.msra.mxu0 %v633
    %918 = vmatprep.subr.bf16.mxu0 0
    %919 = vmatpush1.bf16.msra.mxu0 %v636
    %920 = vmatprep.subr.bf16.mxu0 0
    %921 = vmatpush1.bf16.msra.mxu0 %v639
    %922 = vmatprep.mubr.bf16.mxu0 %v99
    %923 = vmatmul.mubr.bf16.gmra.mrb[0].mxu0 %v77
    %v924 = vpop.f32.mrb[0].mxu0
    %v925 = vadd.f32 0.0, %v924
    %v926 = vpop.f32.mrb[0].mxu0
    %v927 = vpop.f32.mrb[0].mxu0
    %v928 = vadd.f32 0.0, %v927
    %v929 = vpop.f32.mrb[0].mxu0
    %930 = vmatprep.mubr.bf16.mxu0 %v111
    %931 = vmatmul.mubr.bf16.gmra.mrb[0].mxu0 %v78
    %v932 = vpop.f32.mrb[0].mxu0
    %v933 = vadd.f32 0.0, %v932
    %v934 = vpop.f32.mrb[0].mxu0
    %v935 = vpop.f32.mrb[0].mxu0
    %v936 = vadd.f32 0.0, %v935
    %v937 = vpop.f32.mrb[0].mxu0
    %938 = vdwg.mxu0
    %939 = vmatprep.subr.bf16.mxu0 0
    %940 = vmatpush1.bf16.msra.mxu0 %v642
    %941 = vmatprep.subr.bf16.mxu0 0
    %942 = vmatpush1.bf16.msra.mxu0 %v645
    %943 = vmatprep.subr.bf16.mxu0 0
    %944 = vmatpush1.bf16.msra.mxu0 %v648
    %945 = vmatprep.subr.bf16.mxu0 0
    %946 = vmatpush1.bf16.msra.mxu0 %v651
    %947 = vmatprep.subr.bf16.mxu0 0
    %948 = vmatpush1.bf16.msra.mxu0 %v654
    %949 = vmatprep.subr.bf16.mxu0 0
    %950 = vmatpush1.bf16.msra.mxu0 %v657
    %951 = vmatprep.subr.bf16.mxu0 0
    %952 = vmatpush1.bf16.msra.mxu0 %v660
    %953 = vmatprep.subr.bf16.mxu0 0
    %954 = vmatpush1.bf16.msra.mxu0 %v663
    %955 = vmatprep.subr.bf16.mxu0 0
    %956 = vmatpush1.bf16.msra.mxu0 %v666
    %957 = vmatprep.subr.bf16.mxu0 0
    %958 = vmatpush1.bf16.msra.mxu0 %v669
    %959 = vmatprep.subr.bf16.mxu0 0
    %960 = vmatpush1.bf16.msra.mxu0 %v672
    %961 = vmatprep.subr.bf16.mxu0 0
    %962 = vmatpush1.bf16.msra.mxu0 %v675
    %963 = vmatprep.subr.bf16.mxu0 0
    %964 = vmatpush1.bf16.msra.mxu0 %v678
    %965 = vmatprep.subr.bf16.mxu0 0
    %966 = vmatpush1.bf16.msra.mxu0 %v681
    %967 = vmatprep.subr.bf16.mxu0 0
    %968 = vmatpush1.bf16.msra.mxu0 %v684
    %969 = vmatprep.subr.bf16.mxu0 0
    %970 = vmatpush1.bf16.msra.mxu0 %v687
    %971 = vmatprep.mubr.bf16.mxu0 %v132
    %972 = vmatmul.mubr.bf16.gmra.mrb[0].mxu0 %v117
    %v973 = vpop.f32.mrb[0].mxu0
    %v974 = vadd.f32 %v925, %v973
    %v975 = vpop.f32.mrb[0].mxu0
    %v976 = vpop.f32.mrb[0].mxu0
    %v977 = vadd.f32 %v928, %v976
    %v978 = vpop.f32.mrb[0].mxu0
    %979 = vmatprep.mubr.bf16.mxu0 %v141
    %980 = vmatmul.mubr.bf16.gmra.mrb[0].mxu0 %v120
    %v981 = vpop.f32.mrb[0].mxu0
    %v982 = vadd.f32 %v933, %v981
    %v983 = vpop.f32.mrb[0].mxu0
    %v984 = vpop.f32.mrb[0].mxu0
    %v985 = vadd.f32 %v936, %v984
    %v986 = vpop.f32.mrb[0].mxu0
    %987 = vdwg.mxu0
    %vm988 = vcmask 1046528
    %v989 = vsel %vm988, %v876, -inf
    %v990 = vmax.f32 %v872, %v989
    %v991 = vrot.slane %v990, 4
    %v992 = vmax.f32 %v990, %v991
    %v993 = vrot.slane %v992, 2
    %v994 = vmax.f32 %v992, %v993
    %v995 = vrot.slane %v994, 1
    %v996 = vmax.f32 %v994, %v995
    %v997 = vsel %vm988, %v886, -inf
    %v998 = vmax.f32 %v882, %v997
    %v999 = vrot.slane %v998, 4
    %v1000 = vmax.f32 %v998, %v999
    %v1001 = vrot.slane %v1000, 2
    %v1002 = vmax.f32 %v1000, %v1001
    %v1003 = vrot.slane %v1002, 1
    %v1004 = vmax.f32 %v1002, %v1003
    %vm1005 = vcmask 1045504
    %v1006 = vsel %vm1005, %v878, -inf
    %v1007 = vmax.f32 %v874, %v1006
    %v1008 = vrot.slane %v1007, 4
    %v1009 = vmax.f32 %v1007, %v1008
    %v1010 = vrot.slane %v1009, 2
    %v1011 = vmax.f32 %v1009, %v1010
    %v1012 = vrot.slane %v1011, 1
    %v1013 = vmax.f32 %v1011, %v1012
    %v1014 = vsel %vm1005, %v888, -inf
    %v1015 = vmax.f32 %v884, %v1014
    %v1016 = vrot.slane %v1015, 4
    %v1017 = vmax.f32 %v1015, %v1016
    %v1018 = vrot.slane %v1017, 2
    %v1019 = vmax.f32 %v1017, %v1018
    %v1020 = vrot.slane %v1019, 1
    %v1021 = vmax.f32 %v1019, %v1020
    %vm1022 = vcmask 1044480
    %v1023 = vsel %vm1022, %v977, -inf
    %v1024 = vmax.f32 %v974, %v1023
    %v1025 = vrot.slane %v1024, 4
    %v1026 = vmax.f32 %v1024, %v1025
    %v1027 = vrot.slane %v1026, 2
    %v1028 = vmax.f32 %v1026, %v1027
    %v1029 = vrot.slane %v1028, 1
    %v1030 = vmax.f32 %v1028, %v1029
    %v1031 = vsel %vm1022, %v985, -inf
    %v1032 = vmax.f32 %v982, %v1031
    %v1033 = vrot.slane %v1032, 4
    %v1034 = vmax.f32 %v1032, %v1033
    %v1035 = vrot.slane %v1034, 2
    %v1036 = vmax.f32 %v1034, %v1035
    %v1037 = vrot.slane %v1036, 1
    %v1038 = vmax.f32 %v1036, %v1037
    %vm1041 = vcmask 1041409
    %v1042 = vsel %vm1041, %v1004, %v996
    %v1046 = vsel %vm1041, %v1021, %v1013
    %v1050 = vsel %vm1041, %v1038, %v1030
    %v1052 = vld [vmem:[%s2] sm:$0x7]
    %v1054 = vlaneseq
    %v1055 = vshrl.u32 %v1054, 7
    %v1056 = vsub.s32 0, %v1055
    %v1057 = vrot.slane %v1052, %v1056
    %v1058 = vlaneseq
    %v1059 = vshrl.u32 %v1058, 7
    %v1060 = vsub.s32 1, %v1059
    %v1061 = vrot.slane %v1052, %v1060
    %v1062 = vlaneseq
    %v1063 = vshrl.u32 %v1062, 7
    %v1064 = vsub.s32 2, %v1063
    %v1065 = vrot.slane %v1052, %v1064
    %v1069 = vadd.f32 %v1042, %v1057
    %v1070 = vadd.f32 %v1046, %v1061
    %v1071 = vadd.f32 %v1050, %v1065
    %v1072 = vmax.f32 %v1069, 0.0
    %v1073 = vmax.f32 %v1070, 0.0
    %v1074 = vmax.f32 %v1071, 0.0
    %v1075 = vld [vmem:[#allocation7] sm:$0xff]
    %v1076 = vld [vmem:[#allocation7 + $0x8] sm:$0xff]
    %v1077 = vld [vmem:[#allocation7 + $0x10] sm:$0xff]
    %v1078 = vld [vmem:[#allocation7 + $0x18] sm:$0xff]
    %v1079 = vld [vmem:[#allocation7 + $0x20] sm:$0xff]
    %v1080 = vld [vmem:[#allocation7 + $0x28] sm:$0xff]
    %v1081 = vld [vmem:[#allocation7 + $0x30] sm:$0xff]
    %v1082 = vld [vmem:[#allocation7 + $0x38] sm:$0xff]
    %v1083 = vld [vmem:[#allocation7 + $0x40] sm:$0xff]
    %v1084 = vld [vmem:[#allocation7 + $0x48] sm:$0xff]
    %v1085 = vld [vmem:[#allocation7 + $0x50] sm:$0xff]
    %v1086 = vld [vmem:[#allocation7 + $0x58] sm:$0xff]
    %v1087 = vld [vmem:[#allocation7 + $0x60] sm:$0xff]
    %v1088 = vld [vmem:[#allocation7 + $0x68] sm:$0xff]
    %v1089 = vld [vmem:[#allocation7 + $0x70] sm:$0xff]
    %v1090 = vld [vmem:[#allocation7 + $0x78] sm:$0xff]
    %v1091 = vld [vmem:[#allocation7 + $0x80] sm:$0xff]
    %v1092 = vld [vmem:[#allocation7 + $0x88] sm:$0xff]
    %v1093 = vld [vmem:[#allocation7 + $0x90] sm:$0xff]
    %v1094 = vld [vmem:[#allocation7 + $0x98] sm:$0xff]
    %v1095 = vld [vmem:[#allocation7 + $0xa0] sm:$0xff]
    %v1096 = vld [vmem:[#allocation7 + $0xa8] sm:$0xff]
    %v1097 = vld [vmem:[#allocation7 + $0xb0] sm:$0xff]
    %v1098 = vld [vmem:[#allocation7 + $0xb8] sm:$0xff]
    %v1099 = vld [vmem:[#allocation7 + $0xc0] sm:$0xff]
    %v1100 = vld [vmem:[#allocation7 + $0xc8] sm:$0xff]
    %v1101 = vld [vmem:[#allocation7 + $0xd0] sm:$0xff]
    %v1102 = vld [vmem:[#allocation7 + $0xd8] sm:$0xff]
    %v1103 = vld [vmem:[#allocation7 + $0xe0] sm:$0xff]
    %v1104 = vld [vmem:[#allocation7 + $0xe8] sm:$0xff]
    %v1105 = vld [vmem:[#allocation7 + $0xf0] sm:$0xff]
    %v1106 = vld [vmem:[#allocation7 + $0xf8] sm:$0xff]
    %v1107 = vld [vmem:[#allocation7 + $0x100] sm:$0xff]
    %v1108 = vld [vmem:[#allocation7 + $0x108] sm:$0xff]
    %v1109 = vld [vmem:[#allocation7 + $0x110] sm:$0xff]
    %v1110 = vld [vmem:[#allocation7 + $0x118] sm:$0xff]
    %v1111 = vld [vmem:[#allocation7 + $0x120] sm:$0xff]
    %v1112 = vld [vmem:[#allocation7 + $0x128] sm:$0xff]
    %v1113 = vld [vmem:[#allocation7 + $0x130] sm:$0xff]
    %v1114 = vld [vmem:[#allocation7 + $0x138] sm:$0xff]
    %v1115 = vld [vmem:[#allocation7 + $0x140] sm:$0xff]
    %v1116 = vld [vmem:[#allocation7 + $0x148] sm:$0xff]
    %v1117 = vld [vmem:[#allocation7 + $0x150] sm:$0xff]
    %v1118 = vld [vmem:[#allocation7 + $0x158] sm:$0xff]
    %v1119 = vld [vmem:[#allocation7 + $0x160] sm:$0xff]
    %v1120 = vld [vmem:[#allocation7 + $0x168] sm:$0xff]
    %v1121 = vld [vmem:[#allocation7 + $0x170] sm:$0xff]
    %v1122 = vld [vmem:[#allocation7 + $0x178] sm:$0xff]
    %v1123 = vld [vmem:[%s4] sm:$0x1]
    %v1125 = vlaneseq
    %v1126 = vshrl.u32 %v1125, 7
    %v1127 = vsub.s32 0, %v1126
    %v1128 = vrot.slane %v1123, %v1127
    %1130 = vmatprep.subr.mxu0 0.0
    %1131 = vmatpush1.msra.mxu0 %v1075
    %1132 = vmatprep.subr.mxu0 0.0
    %1133 = vmatpush1.msra.mxu0 %v1076
    %1134 = vmatprep.subr.mxu0 0.0
    %1135 = vmatpush1.msra.mxu0 %v1077
    %1136 = vmatprep.subr.mxu0 0.0
    %1137 = vmatpush1.msra.mxu0 %v1078
    %1138 = vmatprep.subr.mxu0 0.0
    %1139 = vmatpush1.msra.mxu0 %v1079
    %1140 = vmatprep.subr.mxu0 0.0
    %1141 = vmatpush1.msra.mxu0 %v1080
    %1142 = vmatprep.subr.mxu0 0.0
    %1143 = vmatpush1.msra.mxu0 %v1081
    %1144 = vmatprep.subr.mxu0 0.0
    %1145 = vmatpush1.msra.mxu0 %v1082
    %1146 = vmatprep.subr.mxu0 0.0
    %1147 = vmatpush1.msra.mxu0 %v1083
    %1148 = vmatprep.subr.mxu0 0.0
    %1149 = vmatpush1.msra.mxu0 %v1084
    %1150 = vmatprep.subr.mxu0 0.0
    %1151 = vmatpush1.msra.mxu0 %v1085
    %1152 = vmatprep.subr.mxu0 0.0
    %1153 = vmatpush1.msra.mxu0 %v1086
    %1154 = vmatprep.subr.mxu0 0.0
    %1155 = vmatpush1.msra.mxu0 %v1087
    %1156 = vmatprep.subr.mxu0 0.0
    %1157 = vmatpush1.msra.mxu0 %v1088
    %1158 = vmatprep.subr.mxu0 0.0
    %1159 = vmatpush1.msra.mxu0 %v1089
    %1160 = vmatprep.subr.mxu0 0.0
    %1161 = vmatpush1.msra.mxu0 %v1090
    %1162 = vmatprep.subr.mxu0 0.0
    %1163 = vmatpush1.msra.mxu0 %v1091
    %1164 = vmatprep.subr.mxu0 0.0
    %1165 = vmatpush1.msra.mxu0 %v1092
    %1166 = vmatprep.subr.mxu0 0.0
    %1167 = vmatpush1.msra.mxu0 %v1093
    %1168 = vmatprep.subr.mxu0 0.0
    %1169 = vmatpush1.msra.mxu0 %v1094
    %1170 = vmatprep.subr.mxu0 0.0
    %1171 = vmatpush1.msra.mxu0 %v1095
    %1172 = vmatprep.subr.mxu0 0.0
    %1173 = vmatpush1.msra.mxu0 %v1096
    %1174 = vmatprep.subr.mxu0 0.0
    %1175 = vmatpush1.msra.mxu0 %v1097
    %1176 = vmatprep.subr.mxu0 0.0
    %1177 = vmatpush1.msra.mxu0 %v1098
    %1178 = vmatprep.subr.mxu0 0.0
    %1179 = vmatpush1.msra.mxu0 %v1099
    %1180 = vmatprep.subr.mxu0 0.0
    %1181 = vmatpush1.msra.mxu0 %v1100
    %1182 = vmatprep.subr.mxu0 0.0
    %1183 = vmatpush1.msra.mxu0 %v1101
    %1184 = vmatprep.subr.mxu0 0.0
    %1185 = vmatpush1.msra.mxu0 %v1102
    %1186 = vmatprep.subr.mxu0 0.0
    %1187 = vmatpush1.msra.mxu0 %v1103
    %1188 = vmatprep.subr.mxu0 0.0
    %1189 = vmatpush1.msra.mxu0 %v1104
    %1190 = vmatprep.subr.mxu0 0.0
    %1191 = vmatpush1.msra.mxu0 %v1105
    %1192 = vmatprep.subr.mxu0 0.0
    %1193 = vmatpush1.msra.mxu0 %v1106
    %1194 = vmatprep.mubr.f32.mxu0 %v1073
    %1195 = vmatmul.mubr.f32.gmra.mrb[0].mxu0 %v1072
    %v1196 = vpop.f32.mrb[0].mxu0
    %v1197 = vadd.f32 %v1128, %v1196
    %v1198 = vpop.f32.mrb[0].mxu0
    %1199 = vdwg.mxu0
    %1200 = vmatprep.subr.mxu0 0.0
    %1201 = vmatpush1.msra.mxu0 %v1107
    %1202 = vmatprep.subr.mxu0 0.0
    %1203 = vmatpush1.msra.mxu0 %v1108
    %1204 = vmatprep.subr.mxu0 0.0
    %1205 = vmatpush1.msra.mxu0 %v1109
    %1206 = vmatprep.subr.mxu0 0.0
    %1207 = vmatpush1.msra.mxu0 %v1110
    %1208 = vmatprep.subr.mxu0 0.0
    %1209 = vmatpush1.msra.mxu0 %v1111
    %1210 = vmatprep.subr.mxu0 0.0
    %1211 = vmatpush1.msra.mxu0 %v1112
    %1212 = vmatprep.subr.mxu0 0.0
    %1213 = vmatpush1.msra.mxu0 %v1113
    %1214 = vmatprep.subr.mxu0 0.0
    %1215 = vmatpush1.msra.mxu0 %v1114
    %1216 = vmatprep.subr.mxu0 0.0
    %1217 = vmatpush1.msra.mxu0 %v1115
    %1218 = vmatprep.subr.mxu0 0.0
    %1219 = vmatpush1.msra.mxu0 %v1116
    %1220 = vmatprep.subr.mxu0 0.0
    %1221 = vmatpush1.msra.mxu0 %v1117
    %1222 = vmatprep.subr.mxu0 0.0
    %1223 = vmatpush1.msra.mxu0 %v1118
    %1224 = vmatprep.subr.mxu0 0.0
    %1225 = vmatpush1.msra.mxu0 %v1119
    %1226 = vmatprep.subr.mxu0 0.0
    %1227 = vmatpush1.msra.mxu0 %v1120
    %1228 = vmatprep.subr.mxu0 0.0
    %1229 = vmatpush1.msra.mxu0 %v1121
    %1230 = vmatprep.subr.mxu0 0.0
    %1231 = vmatpush1.msra.mxu0 %v1122
    %1232 = vmatprep.subr.mxu0 0.0
    %1233 = vmatpush1.msra.mxu0 0.0
    %1234 = vmatprep.subr.mxu0 0.0
    %1235 = vmatpush1.msra.mxu0 0.0
    %1236 = vmatprep.subr.mxu0 0.0
    %1237 = vmatpush1.msra.mxu0 0.0
    %1238 = vmatprep.subr.mxu0 0.0
    %1239 = vmatpush1.msra.mxu0 0.0
    %1240 = vmatprep.subr.mxu0 0.0
    %1241 = vmatpush1.msra.mxu0 0.0
    %1242 = vmatprep.subr.mxu0 0.0
    %1243 = vmatpush1.msra.mxu0 0.0
    %1244 = vmatprep.subr.mxu0 0.0
    %1245 = vmatpush1.msra.mxu0 0.0
    %1246 = vmatprep.subr.mxu0 0.0
    %1247 = vmatpush1.msra.mxu0 0.0
    %1248 = vmatprep.subr.mxu0 0.0
    %1249 = vmatpush1.msra.mxu0 0.0
    %1250 = vmatprep.subr.mxu0 0.0
    %1251 = vmatpush1.msra.mxu0 0.0
    %1252 = vmatprep.subr.mxu0 0.0
    %1253 = vmatpush1.msra.mxu0 0.0
    %1254 = vmatprep.subr.mxu0 0.0
    %1255 = vmatpush1.msra.mxu0 0.0
    %1256 = vmatprep.subr.mxu0 0.0
    %1257 = vmatpush1.msra.mxu0 0.0
    %1258 = vmatprep.subr.mxu0 0.0
    %1259 = vmatpush1.msra.mxu0 0.0
    %1260 = vmatprep.subr.mxu0 0.0
    %1261 = vmatpush1.msra.mxu0 0.0
    %1262 = vmatprep.subr.mxu0 0.0
    %1263 = vmatpush1.msra.mxu0 0.0
    %1264 = vmatprep.mubr.f32.mxu0 0.0
    %1265 = vmatmul.mubr.f32.gmra.mrb[0].mxu0 %v1074
    %v1266 = vpop.f32.mrb[0].mxu0
    %v1267 = vadd.f32 %v1197, %v1266
    %v1268 = vpop.f32.mrb[0].mxu0
    %1269 = vdwg.mxu0
    %1270 = vst [vmem:[#allocation8] sm:$0x3] %v1267
    // Predicated region
    $region34: #{tpu_custom_call.1} parent=1 // pred_check
      _
    $region35: #{tpu_custom_call.1} parent=1 // pred_check_branch
      %1272 = sbr.rel (0) target = $region37
    $region36: #{tpu_custom_call.1} parent=1 // pred_region
      %s1274 = ssub.s32 32, 32
      %1275 = vsyncadd [#allocation4], %s1274
      %s1277 = sshll.u32 [#allocation8], 4
      %s1278 = int_to_ptr.vmem [resolvable:$true] %s1277
      %1280 = dma.vmem_to_hbm [thread:$0]  %s1278, 32, %s5, [#allocation4]
    $region37: #{tpu_custom_call.1} parent=1 // pred_fallthru
      _
    // Predicated region
    $region38: #{tpu_custom_call.1} parent=1 // pred_check
      _
    $region39: #{tpu_custom_call.1} parent=1 // pred_check_branch
      %1282 = sbr.rel (0) target = $region41
    $region40: #{tpu_custom_call.1} parent=1 // pred_region
      %1283 = dma.done [#allocation4], 32
    $region41: #{tpu_custom_call.1} parent=1 // pred_fallthru
      _
    %1284 = vsyncpa [#allocation3], 1
    %1285 = vsyncpa [#allocation6], 1
    %1286 = vsyncpa [#allocation4], 1

</llo_original>
